<compile_context>
chip_gen: v7x
topology: tpu7x:2x2x1
jax: 0.10.0
libtpu: 0.0.40
codegen_flags: <defaults>
</compile_context>

<pallas_src>
import functools

import jax
import jax.numpy as jnp
from jax import lax
from jax.experimental import pallas as pl
from jax.experimental.pallas import tpu as pltpu


def _maxpool_stride1_kernel(k, s, h, w, oh, ow, x_ref, o_ref, acc_ref, hpool_ref=None):
    """One (batch, channel-tile) block.

    x_ref:   (tc, h, w)   unpadded input block (VMEM)
    o_ref:   (tc, oh, ow) final (already strided) output block (VMEM)
    acc_ref: (tc, h, w)   scratch: W-direction stride-1 pooled rows
    hpool_ref: (tc, oh, w) scratch, only when s > 1 (H pooled+strided, pre W-subsample)
    """
    # ---- W-direction clamped stride-1 max-pool (replicate pad fused by dropping
    #      out-of-range taps: the boundary column is always an in-range tap). ----
    acc_ref[...] = x_ref[...]
    for d in range(1, k):
        acc_ref[:, :, 0:w - d] = jnp.maximum(acc_ref[:, :, 0:w - d],
                                             x_ref[:, :, d:w])

    if s == 1:
        # kernel_size == 2 (the canonical MaxPoolStride1): H-direction stride-1
        # pass accumulates straight into the output block.
        o_ref[...] = acc_ref[...]
        for d in range(1, k):
            o_ref[:, 0:h - d, :] = jnp.maximum(o_ref[:, 0:h - d, :],
                                               acc_ref[:, d:h, :])
    else:
        # kernel_size > 2: evaluate only the strided output rows (fused H-pool +
        # H-stride), then compact the strided output columns in VMEM.
        for i in range(oh):
            r0 = i * s
            row = acc_ref[:, r0:r0 + 1, :]
            for d in range(1, k):
                rr = min(r0 + d, h - 1)          # replicate-pad clamp (static)
                row = jnp.maximum(row, acc_ref[:, rr:rr + 1, :])
            hpool_ref[:, i:i + 1, :] = row
        for j in range(ow):                      # W-stride subsample, all in VMEM
            o_ref[:, :, j:j + 1] = hpool_ref[:, :, j * s:j * s + 1]


def _pick_channel_tile(c, h, w, oh, ow, s, itemsize, budget_bytes=8 * 1024 * 1024):
    """Largest divisor of C whose per-grid-step VMEM footprint fits the budget."""
    for cand in range(c, 0, -1):
        if c % cand:
            continue
        per_step = itemsize * cand * (
            2 * h * w            # input block, double-buffered
            + 2 * oh * ow        # output block, double-buffered
            + h * w              # acc scratch
            + (oh * w if s > 1 else 0))
        if per_step <= budget_bytes:
            return cand
    return 1


def maxpool_stride1(x, kernel_size):
    """Pallas equivalent of MaxPoolStride1.forward for NCHW input."""
    assert kernel_size >= 2, "MaxPoolStride1 requires kernel_size >= 2"
    n, c, h, w = x.shape
    assert kernel_size <= min(h, w), "kernel_size larger than spatial dims"
    k = kernel_size
    s = k - 1                                  # nn.MaxPool2d stride = pad = k - 1
    oh = (h - 1) // s + 1                      # == floor((H + pad - k) / s) + 1
    ow = (w - 1) // s + 1

    tc = _pick_channel_tile(c, h, w, oh, ow, s, x.dtype.itemsize)

    scratch_shapes = [pltpu.VMEM((tc, h, w), x.dtype)]
    if s > 1:
        scratch_shapes.append(pltpu.VMEM((tc, oh, w), x.dtype))

    kernel = functools.partial(_maxpool_stride1_kernel, k, s, h, w, oh, ow)
    return pl.pallas_call(
        kernel,
        out_shape=jax.ShapeDtypeStruct((n, c, oh, ow), x.dtype),
        grid=(n, c // tc),
        in_specs=[pl.BlockSpec((None, tc, h, w), lambda b, ci: (b, ci, 0, 0))],
        out_specs=pl.BlockSpec((None, tc, oh, ow), lambda b, ci: (b, ci, 0, 0)),
        scratch_shapes=scratch_shapes,
        compiler_params=pltpu.CompilerParams(
            dimension_semantics=("parallel", "parallel")),
    )(x)


def _reference_maxpool_stride1(x, kernel_size):
    """Pure-JAX reference (XLA reduce_window), independent of the kernel code."""
    pad = kernel_size - 1
    xp = jnp.pad(x, ((0, 0), (0, 0), (0, pad), (0, pad)), mode="edge")
    if jnp.issubdtype(x.dtype, jnp.floating):
        init = jnp.array(-jnp.inf, dtype=x.dtype)
    else:
        init = jnp.array(jnp.iinfo(x.dtype).min, dtype=x.dtype)
    return lax.reduce_window(
        xp, init, lax.max,
        window_dimensions=(1, 1, kernel_size, kernel_size),
        window_strides=(1, 1, pad, pad),
        padding="VALID")


if __name__ == "__main__":
    x = jax.random.normal(jax.random.PRNGKey(0), (2, 4, 16, 16), jnp.float32)

    # Canonical usage: kernel_size=2 -> pad=1, stride=1, output same H x W.
    out2 = jax.block_until_ready(maxpool_stride1(x, kernel_size=2))
    ref2 = _reference_maxpool_stride1(x, kernel_size=2)
    assert out2.shape == (2, 4, 16, 16), out2.shape
    assert jnp.allclose(out2, ref2), "kernel_size=2 mismatch"

    # General path: kernel_size=3 -> pad=2, stride=2, strided output written directly.
    out3 = jax.block_until_ready(maxpool_stride1(x, kernel_size=3))
    ref3 = _reference_maxpool_stride1(x, kernel_size=3)
    assert out3.shape == ref3.shape == (2, 4, 8, 8), (out3.shape, ref3.shape)
    assert jnp.allclose(out3, ref3), "kernel_size=3 mismatch"

    print("KERNEL_OK")
</pallas_src>

<mosaic_0001>
module attributes {stable_mosaic.version = 11 : i64} {
  func.func @_maxpool_stride1_kernel(%arg0: i32, %arg1: i32, %arg2: memref<1x4x16x16xf32, #tpu.memory_space<vmem>>, %arg3: memref<1x4x16x16xf32, #tpu.memory_space<vmem>>, %arg4: memref<4x16x16xf32, #tpu.memory_space<vmem>>) attributes {dimension_semantics = [#tpu.dimension_semantics<parallel>, #tpu.dimension_semantics<parallel>], iteration_bounds = array<i64: 2, 1>, scalar_prefetch = 0 : i64, scratch_operands = 1 : i64, tpu.core_type = #tpu.core_type<tc>, window_params = [{transform_indices = @transform_0, window_bounds = array<i64: 1, 4, 16, 16>}, {transform_indices = @transform_1, window_bounds = array<i64: 1, 4, 16, 16>}]} {
    %c0 = arith.constant 0 : index
    %c0_0 = arith.constant 0 : index
    %c0_1 = arith.constant 0 : index
    %c0_2 = arith.constant 0 : index
    %0 = vector.load %arg2[%c0, %c0_0, %c0_1, %c0_2] : memref<1x4x16x16xf32, #tpu.memory_space<vmem>>, vector<1x4x16x16xf32>
    %1 = vector.shape_cast %0 : vector<1x4x16x16xf32> to vector<4x16x16xf32>
    %c0_3 = arith.constant 0 : index
    %c0_4 = arith.constant 0 : index
    %c0_5 = arith.constant 0 : index
    %2 = vector.load %arg4[%c0_3, %c0_4, %c0_5] : memref<4x16x16xf32, #tpu.memory_space<vmem>>, vector<4x16x16xf32>
    tpu.vector_store %arg4[%c0_3, %c0_4, %c0_5], %1 {strides = array<i32>} : memref<4x16x16xf32, #tpu.memory_space<vmem>>, vector<4x16x16xf32>,
    %c0_6 = arith.constant 0 : index
    %c0_7 = arith.constant 0 : index
    %c0_8 = arith.constant 0 : index
    %3 = vector.load %arg4[%c0_6, %c0_7, %c0_8] : memref<4x16x16xf32, #tpu.memory_space<vmem>>, vector<4x16x15xf32>
    %c0_9 = arith.constant 0 : index
    %c0_10 = arith.constant 0 : index
    %c0_11 = arith.constant 0 : index
    %c1 = arith.constant 1 : index
    %4 = vector.load %arg2[%c0_9, %c0_10, %c0_11, %c1] : memref<1x4x16x16xf32, #tpu.memory_space<vmem>>, vector<1x4x16x15xf32>
    %5 = vector.shape_cast %4 : vector<1x4x16x15xf32> to vector<4x16x15xf32>
    %6 = arith.maximumf %3, %5 : vector<4x16x15xf32>
    %c0_12 = arith.constant 0 : index
    %c0_13 = arith.constant 0 : index
    %c0_14 = arith.constant 0 : index
    %7 = vector.load %arg4[%c0_12, %c0_13, %c0_14] : memref<4x16x16xf32, #tpu.memory_space<vmem>>, vector<4x16x15xf32>
    tpu.vector_store %arg4[%c0_12, %c0_13, %c0_14], %6 {strides = array<i32>} : memref<4x16x16xf32, #tpu.memory_space<vmem>>, vector<4x16x15xf32>,
    %c0_15 = arith.constant 0 : index
    %c0_16 = arith.constant 0 : index
    %c0_17 = arith.constant 0 : index
    %8 = vector.load %arg4[%c0_15, %c0_16, %c0_17] : memref<4x16x16xf32, #tpu.memory_space<vmem>>, vector<4x16x16xf32>
    %c0_18 = arith.constant 0 : index
    %c0_19 = arith.constant 0 : index
    %c0_20 = arith.constant 0 : index
    %c0_21 = arith.constant 0 : index
    %9 = vector.load %arg3[%c0_18, %c0_19, %c0_20, %c0_21] : memref<1x4x16x16xf32, #tpu.memory_space<vmem>>, vector<1x4x16x16xf32>
    %10 = vector.shape_cast %9 : vector<1x4x16x16xf32> to vector<4x16x16xf32>
    %11 = vector.shape_cast %8 : vector<4x16x16xf32> to vector<1x4x16x16xf32>
    tpu.vector_store %arg3[%c0_18, %c0_19, %c0_20, %c0_21], %11 {strides = array<i32>} : memref<1x4x16x16xf32, #tpu.memory_space<vmem>>, vector<1x4x16x16xf32>,
    %c0_22 = arith.constant 0 : index
    %c0_23 = arith.constant 0 : index
    %c0_24 = arith.constant 0 : index
    %c0_25 = arith.constant 0 : index
    %12 = vector.load %arg3[%c0_22, %c0_23, %c0_24, %c0_25] : memref<1x4x16x16xf32, #tpu.memory_space<vmem>>, vector<1x4x15x16xf32>
    %13 = vector.shape_cast %12 : vector<1x4x15x16xf32> to vector<4x15x16xf32>
    %c0_26 = arith.constant 0 : index
    %c1_27 = arith.constant 1 : index
    %c0_28 = arith.constant 0 : index
    %14 = vector.load %arg4[%c0_26, %c1_27, %c0_28] : memref<4x16x16xf32, #tpu.memory_space<vmem>>, vector<4x15x16xf32>
    %15 = arith.maximumf %13, %14 : vector<4x15x16xf32>
    %c0_29 = arith.constant 0 : index
    %c0_30 = arith.constant 0 : index
    %c0_31 = arith.constant 0 : index
    %c0_32 = arith.constant 0 : index
    %16 = vector.load %arg3[%c0_29, %c0_30, %c0_31, %c0_32] : memref<1x4x16x16xf32, #tpu.memory_space<vmem>>, vector<1x4x15x16xf32>
    %17 = vector.shape_cast %16 : vector<1x4x15x16xf32> to vector<4x15x16xf32>
    %18 = vector.shape_cast %15 : vector<4x15x16xf32> to vector<1x4x15x16xf32>
    tpu.vector_store %arg3[%c0_29, %c0_30, %c0_31, %c0_32], %18 {strides = array<i32>} : memref<1x4x16x16xf32, #tpu.memory_space<vmem>>, vector<1x4x15x16xf32>,
    return
  }
  func.func @transform_0(%arg0: i32, %arg1: i32) -> (i32, i32, i32, i32) {
    %c0_i32 = arith.constant 0 : i32
    %c0_i32_0 = arith.constant 0 : i32
    %c0_i32_1 = arith.constant 0 : i32
    return %arg0, %arg1, %c0_i32, %c0_i32_0 : i32, i32, i32, i32
  }
  func.func @transform_1(%arg0: i32, %arg1: i32) -> (i32, i32, i32, i32) {
    %c0_i32 = arith.constant 0 : i32
    %c0_i32_0 = arith.constant 0 : i32
    %c0_i32_1 = arith.constant 0 : i32
    return %arg0, %arg1, %c0_i32, %c0_i32_0 : i32, i32, i32, i32
  }
}

</mosaic_0001>

<llo_original>
// kernel: tpu_custom_call.1
$region0: #{tpu_custom_call.1}
  #allocation0 [shape = 'u32[]', space=smem, size = 0x4, offset = 0x4, fixed_abs, tag = 'smem constant byte address 0x4 - core index']
  #allocation1 [shape = 'u32[144,128]{1,0:T(1,128)}', space=vmem, size = 0x12000, scoped, tag = 'internal scratch']
  #allocation2 [shape = 'f32[4,16,16]{2,1,0:T(8,128)}', space=vmem, size = 0x8000, scoped, tag = 'scratch operand']
  %s0 = inlined_call_operand.hbm [shape: f32[2,4,16,16], index: 0, kind: input, shape index: {}]
  %s1 = inlined_call_operand.hbm [shape: f32[2,4,16,16], index: 1, kind: output, shape index: {}]
  %s2 = sld [smem:[#allocation0]]
  $region41: #{tpu_custom_call.1} parent=0
    _
  %s4 = ssub.s32 1, %s2
  %s5 = scalar_select 0, %s4, %s2
  $region1: #{tpu_custom_call.1} parent=0
    #allocation3 [shape = 'u8[65536]{0}', space=vmem, size = 0x10000, scoped, tag = 'input window, operand 0']
    #allocation4 [shape = 's32[2]{0}', space=sflag, size = 0x8, scoped, tag = 'scoped memory for tpu_custom_call.1']
    #allocation5 [shape = 's32[2]{0}', space=sflag, size = 0x8, scoped, tag = 'scoped memory for tpu_custom_call.1']
    #allocation6 [shape = 'u8[65536]{0}', space=vmem, size = 0x10000, scoped, tag = 'output window, operand 0']
    %6 = vsyncpa [#allocation4], 0
    %s7 = scalar_lea.sflag [#allocation4], 1
    %8 = vsyncpa %s7, 0
    %9 = vsyncpa [#allocation5], 0
    %s10 = scalar_lea.sflag [#allocation5], 1
    %11 = vsyncpa %s10, 0
    loop: start=0, step=1, limit=4
    $region2: #{tpu_custom_call.1} parent=1 // loop_pre_header
      _
    $region3: #{tpu_custom_call.1} parent=1 // loop_header
      %s13 = sphi 0, %s17
      %p14 = scmp.ge.s32.totalorder %s13, 4
      %s20 = sphi 0, %s32
      %s21 = sphi 0, %s28
      %s22 = sphi 0, %s20
      %s23 = sphi 0, %s21
      %s24 = sphi 0, %s22
      %s25 = sphi 0, %s23
      %s37 = sphi 0, %s39
      %s40 = sphi 0, %s37
      %s41 = sphi 0, %s40
      %s57 = sphi 0, %s41
      %s65 = sphi 0, %s67
      %s68 = sphi 0, %s65
      %s69 = sphi 0, %s68
      %s85 = sphi 0, %s69
    $region4: #{tpu_custom_call.1} parent=1 // loop_header_branch
      %16 = sbr.rel (%p14) target = $region8
    $region5: #{tpu_custom_call.1} parent=1 // loop_body
      %s18 = ssub.s32 %s13, 1
      %s19 = ssub.s32 %s13, 2
      %s26 = sadd.s32 1, %s21
      %p27 = scmp.ge.s32.totalorder %s26, 1
      %s28 = scalar_select %p27, 0, %s26
      %s29 = sadd.s32 1, %s20
      %s30 = scalar_select %p27, %s29, %s20
      %p31 = scmp.ge.s32.totalorder %s30, 2
      %s32 = scalar_select %p31, 0, %s30
      %s33 = ssub.s32 %s20, %s32
      %s34 = ssub.s32 %s21, %s28
      %s35 = sor.u32 %s33, %s34
      %p36 = scmp.eq.s32.totalorder %s35, 0
      %s38 = sadd.s32 %s37, 1
      %s39 = scalar_select %p36, %s37, %s38
      %p42 = pneg %p36
      %p43 = scmp.eq.s32.totalorder %s13, 1
      %p44 = por %p42, %p43
      %p45 = scmp.ne.s32.totalorder %s37, %s40
      %p46 = scmp.eq.s32.totalorder %s13, 0
      %p47 = por %p45, %p46
      %p48 = scmp.ne.s32.totalorder %s37, %s40
      %p49 = scmp.eq.s32.totalorder %s18, 1
      %p50 = por %p48, %p49
      %p51 = scmp.ne.s32.totalorder %s40, %s41
      %p52 = scmp.eq.s32.totalorder %s18, 0
      %p53 = por %p51, %p52
      %p54 = scmp.ne.s32.totalorder %s40, %s41
      %p55 = scmp.eq.s32.totalorder %s19, 1
      %p56 = por %p54, %p55
      %p58 = scmp.ne.s32.totalorder %s41, %s57
      %p59 = scmp.eq.s32.totalorder %s19, 0
      %p60 = por %p58, %p59
      %s61 = ssub.s32 %s20, %s32
      %s62 = ssub.s32 %s21, %s28
      %s63 = sor.u32 %s61, %s62
      %p64 = scmp.eq.s32.totalorder %s63, 0
      %s66 = sadd.s32 %s65, 1
      %s67 = scalar_select %p64, %s65, %s66
      %p70 = pneg %p64
      %p71 = scmp.eq.s32.totalorder %s13, 1
      %p72 = por %p70, %p71
      %p73 = scmp.ne.s32.totalorder %s65, %s68
      %p74 = scmp.eq.s32.totalorder %s13, 0
      %p75 = por %p73, %p74
      %p76 = scmp.ne.s32.totalorder %s65, %s68
      %p77 = scmp.eq.s32.totalorder %s18, 1
      %p78 = por %p76, %p77
      %p79 = scmp.ne.s32.totalorder %s68, %s69
      %p80 = scmp.eq.s32.totalorder %s18, 0
      %p81 = por %p79, %p80
      %p82 = scmp.ne.s32.totalorder %s68, %s69
      %p83 = scmp.eq.s32.totalorder %s19, 1
      %p84 = por %p82, %p83
      %p86 = scmp.ne.s32.totalorder %s69, %s85
      %p87 = scmp.eq.s32.totalorder %s19, 0
      %p88 = por %p86, %p87
      %p89 = scmp.le.s32.totalorder 1, %s13
      %p90 = scmp.lt.s32.totalorder %s13, 3
      %p91 = pnand %p89, %p90
      %p92 = pneg %p91
      // Predicated region
      $region9: #{tpu_custom_call.1} parent=5 // pred_check
        _
      $region10: #{tpu_custom_call.1} parent=5 // pred_check_branch
        %94 = sbr.rel (%p91) target = $region12
      $region11: #{tpu_custom_call.1} parent=5 // pred_region
        %s95 = ssub.s32 %s13, 1
      $region12: #{tpu_custom_call.1} parent=5 // pred_fallthru
        _
      %p96 = scmp.lt.s32.totalorder %s13, 2
      // Predicated region
      $region13: #{tpu_custom_call.1} parent=5 // pred_check
        %p97 = pneg %p96
      $region14: #{tpu_custom_call.1} parent=5 // pred_check_branch
        %99 = sbr.rel (%p97) target = $region16
      $region15: #{tpu_custom_call.1} parent=5 // pred_region
        // Predicated region
        $region17: #{tpu_custom_call.1} parent=15 // pred_check
          %p100 = pneg %p47
        $region18: #{tpu_custom_call.1} parent=15 // pred_check_branch
          %102 = sbr.rel (%p100) target = $region20
        $region19: #{tpu_custom_call.1} parent=15 // pred_region
          %s103 = sand.u32 %s37, 1
          %s104 = scalar_lea.sflag [#allocation4], %s103
          %s105 = sand.u32 %s37, 1
          %s106 = smul.addr %s105, 64
          %s107 = scalar_lea.vmem [#allocation3], %s106
          %s108 = smul.u32 4, %s21
          %s110 = ssub.s32 1024, 1024
          %111 = vsyncadd %s104, %s110
          %s112 = smul.addr %s108, 2
          %s113 = smul.addr %s20, 8
          %s114 = sadd.s32 %s112, %s113
          %s115 = smul.addr %s114, 128
          %s116 = scalar_lea.hbm %s0, %s115
          %s117 = sshll.u32 %s107, 4
          %s118 = int_to_ptr.vmem [resolvable:$true] %s117
          %123 = dma.hbm_to_vmem [thread:$0]  %s116, 1024, %s118, %s104, 128, 128, 8
        $region20: #{tpu_custom_call.1} parent=15 // pred_fallthru
          _
      $region16: #{tpu_custom_call.1} parent=5 // pred_fallthru
        _
      %p124 = scmp.le.s32.totalorder 1, %s13
      %p125 = scmp.lt.s32.totalorder %s13, 3
      %p126 = pnand %p124, %p125
      %p127 = pneg %p126
      // Predicated region
      $region21: #{tpu_custom_call.1} parent=5 // pred_check
        _
      $region22: #{tpu_custom_call.1} parent=5 // pred_check_branch
        %129 = sbr.rel (%p126) target = $region24
      $region23: #{tpu_custom_call.1} parent=5 // pred_region
        %s130 = ssub.s32 %s13, 1
        %s131 = sand.u32 %s40, 1
        %s132 = scalar_lea.sflag [#allocation4], %s131
        %s133 = sand.u32 %s40, 1
        %s134 = smul.addr %s133, 64
        %s135 = scalar_lea.vmem [#allocation3], %s134
        // Predicated region
        $region25: #{tpu_custom_call.1} parent=23 // pred_check
          %p136 = pneg %p53
        $region26: #{tpu_custom_call.1} parent=23 // pred_check_branch
          %138 = sbr.rel (%p136) target = $region28
        $region27: #{tpu_custom_call.1} parent=23 // pred_region
          %139 = dma.done %s132, 1024
        $region28: #{tpu_custom_call.1} parent=23 // pred_fallthru
          _
        %s140 = sand.u32 %s40, 1
        %s141 = scalar_lea.sflag [#allocation4], %s140
        %s142 = sand.u32 %s40, 1
        %s143 = smul.addr %s142, 64
        %s144 = scalar_lea.vmem [#allocation3], %s143
        %p145 = pneg %p53
        %p146 = pneg %p50
        %p147 = pneg %p81
        %p148 = pneg %p78
        %s149 = sand.u32 %s68, 1
        %s150 = scalar_lea.sflag [#allocation5], %s149
        %s151 = sand.u32 %s68, 1
        %s152 = smul.addr %s151, 64
        %s153 = scalar_lea.vmem [#allocation6], %s152
        %s154 = smul.u32 4, %s23
        %s155 = smul.u32 4, %s23
        %v156 = vld [vmem:[%s135] sm:$0xff]
        %v157 = vld [vmem:[%s135 + $0x8] sm:$0xff]
        %v158 = vld [vmem:[%s135 + $0x10] sm:$0xff]
        %v159 = vld [vmem:[%s135 + $0x18] sm:$0xff]
        %v160 = vld [vmem:[%s135 + $0x20] sm:$0xff]
        %v161 = vld [vmem:[%s135 + $0x28] sm:$0xff]
        %v162 = vld [vmem:[%s135 + $0x30] sm:$0xff]
        %v163 = vld [vmem:[%s135 + $0x38] sm:$0xff]
        %vm164 = vcmask 130048
        %165 = vst.msk [vmem:[#allocation2] sm:$0xff] %vm164, %v156
        %166 = vst.msk [vmem:[#allocation2 + $0x8] sm:$0xff] %vm164, %v157
        %167 = vst.msk [vmem:[#allocation2 + $0x10] sm:$0xff] %vm164, %v158
        %168 = vst.msk [vmem:[#allocation2 + $0x18] sm:$0xff] %vm164, %v159
        %169 = vst.msk [vmem:[#allocation2 + $0x20] sm:$0xff] %vm164, %v160
        %170 = vst.msk [vmem:[#allocation2 + $0x28] sm:$0xff] %vm164, %v161
        %171 = vst.msk [vmem:[#allocation2 + $0x30] sm:$0xff] %vm164, %v162
        %172 = vst.msk [vmem:[#allocation2 + $0x38] sm:$0xff] %vm164, %v163
        %v173 = vld [vmem:[#allocation2] sm:$0xff]
        %v174 = vld [vmem:[#allocation2 + $0x8] sm:$0xff]
        %v175 = vld [vmem:[#allocation2 + $0x10] sm:$0xff]
        %v176 = vld [vmem:[#allocation2 + $0x18] sm:$0xff]
        %v177 = vld [vmem:[#allocation2 + $0x20] sm:$0xff]
        %v178 = vld [vmem:[#allocation2 + $0x28] sm:$0xff]
        %v179 = vld [vmem:[#allocation2 + $0x30] sm:$0xff]
        %v180 = vld [vmem:[#allocation2 + $0x38] sm:$0xff]
        %v181 = vld [vmem:[%s135] sm:$0xff]
        %v182 = vld [vmem:[%s135 + $0x8] sm:$0xff]
        %v183 = vld [vmem:[%s135 + $0x10] sm:$0xff]
        %v184 = vld [vmem:[%s135 + $0x18] sm:$0xff]
        %v185 = vld [vmem:[%s135 + $0x20] sm:$0xff]
        %v186 = vld [vmem:[%s135 + $0x28] sm:$0xff]
        %v187 = vld [vmem:[%s135 + $0x30] sm:$0xff]
        %v188 = vld [vmem:[%s135 + $0x38] sm:$0xff]
        %197 = vrot.lane.b32.xlu0 %v181, 127
        %v198 = vpop.permute.xlu0 %197
        %199 = vrot.lane.b32.xlu0 %v182, 127
        %v200 = vpop.permute.xlu0 %199
        %201 = vrot.lane.b32.xlu0 %v183, 127
        %v202 = vpop.permute.xlu0 %201
        %203 = vrot.lane.b32.xlu0 %v184, 127
        %v204 = vpop.permute.xlu0 %203
        %205 = vrot.lane.b32.xlu0 %v185, 127
        %v206 = vpop.permute.xlu0 %205
        %207 = vrot.lane.b32.xlu0 %v186, 127
        %v208 = vpop.permute.xlu0 %207
        %209 = vrot.lane.b32.xlu0 %v187, 127
        %v210 = vpop.permute.xlu0 %209
        %211 = vrot.lane.b32.xlu0 %v188, 127
        %v212 = vpop.permute.xlu0 %211
        %v221 = vmax.f32 %v173, %v198
        %v222 = vmax.f32 %v174, %v200
        %v223 = vmax.f32 %v175, %v202
        %v224 = vmax.f32 %v176, %v204
        %v225 = vmax.f32 %v177, %v206
        %v226 = vmax.f32 %v178, %v208
        %v227 = vmax.f32 %v179, %v210
        %v228 = vmax.f32 %v180, %v212
        %vm229 = vcmask 121856
        %230 = vst.msk [vmem:[#allocation2] sm:$0xff] %vm229, %v221
        %231 = vst.msk [vmem:[#allocation2 + $0x8] sm:$0xff] %vm229, %v222
        %232 = vst.msk [vmem:[#allocation2 + $0x10] sm:$0xff] %vm229, %v223
        %233 = vst.msk [vmem:[#allocation2 + $0x18] sm:$0xff] %vm229, %v224
        %234 = vst.msk [vmem:[#allocation2 + $0x20] sm:$0xff] %vm229, %v225
        %235 = vst.msk [vmem:[#allocation2 + $0x28] sm:$0xff] %vm229, %v226
        %236 = vst.msk [vmem:[#allocation2 + $0x30] sm:$0xff] %vm229, %v227
        %237 = vst.msk [vmem:[#allocation2 + $0x38] sm:$0xff] %vm229, %v228
        %v238 = vld [vmem:[#allocation2] sm:$0xff]
        %v239 = vld [vmem:[#allocation2 + $0x8] sm:$0xff]
        %v240 = vld [vmem:[#allocation2 + $0x10] sm:$0xff]
        %v241 = vld [vmem:[#allocation2 + $0x18] sm:$0xff]
        %v242 = vld [vmem:[#allocation2 + $0x20] sm:$0xff]
        %v243 = vld [vmem:[#allocation2 + $0x28] sm:$0xff]
        %v244 = vld [vmem:[#allocation2 + $0x30] sm:$0xff]
        %v245 = vld [vmem:[#allocation2 + $0x38] sm:$0xff]
        %246 = vst.msk [vmem:[%s153] sm:$0xff] %vm164, %v238
        %247 = vst.msk [vmem:[%s153 + $0x8] sm:$0xff] %vm164, %v239
        %248 = vst.msk [vmem:[%s153 + $0x10] sm:$0xff] %vm164, %v240
        %249 = vst.msk [vmem:[%s153 + $0x18] sm:$0xff] %vm164, %v241
        %250 = vst.msk [vmem:[%s153 + $0x20] sm:$0xff] %vm164, %v242
        %251 = vst.msk [vmem:[%s153 + $0x28] sm:$0xff] %vm164, %v243
        %252 = vst.msk [vmem:[%s153 + $0x30] sm:$0xff] %vm164, %v244
        %253 = vst.msk [vmem:[%s153 + $0x38] sm:$0xff] %vm164, %v245
        %v254 = vld [vmem:[%s153] sm:$0xff]
        %v255 = vld [vmem:[%s153 + $0x8] sm:$0x7f]
        %v256 = vld [vmem:[%s153 + $0x10] sm:$0xff]
        %v257 = vld [vmem:[%s153 + $0x18] sm:$0x7f]
        %v258 = vld [vmem:[%s153 + $0x20] sm:$0xff]
        %v259 = vld [vmem:[%s153 + $0x28] sm:$0x7f]
        %v260 = vld [vmem:[%s153 + $0x30] sm:$0xff]
        %v261 = vld [vmem:[%s153 + $0x38] sm:$0x7f]
        %v262 = vld [vmem:[#allocation2 + $0x1] sm:$0xff]
        %v263 = vld [vmem:[#allocation2 + $0x9] sm:$0x7f]
        %v264 = vld [vmem:[#allocation2 + $0x11] sm:$0xff]
        %v265 = vld [vmem:[#allocation2 + $0x19] sm:$0x7f]
        %v266 = vld [vmem:[#allocation2 + $0x21] sm:$0xff]
        %v267 = vld [vmem:[#allocation2 + $0x29] sm:$0x7f]
        %v268 = vld [vmem:[#allocation2 + $0x31] sm:$0xff]
        %v269 = vld [vmem:[#allocation2 + $0x39] sm:$0x7f]
        %v270 = vmax.f32 %v254, %v262
        %v271 = vmax.f32 %v255, %v263
        %v272 = vmax.f32 %v256, %v264
        %v273 = vmax.f32 %v257, %v265
        %v274 = vmax.f32 %v258, %v266
        %v275 = vmax.f32 %v259, %v267
        %v276 = vmax.f32 %v260, %v268
        %v277 = vmax.f32 %v261, %v269
        %278 = vst.msk [vmem:[%s153] sm:$0xff] %vm164, %v270
        %vm279 = vcmask 129024
        %280 = vst.msk [vmem:[%s153 + $0x8] sm:$0x7f] %vm279, %v271
        %281 = vst.msk [vmem:[%s153 + $0x10] sm:$0xff] %vm164, %v272
        %282 = vst.msk [vmem:[%s153 + $0x18] sm:$0x7f] %vm279, %v273
        %283 = vst.msk [vmem:[%s153 + $0x20] sm:$0xff] %vm164, %v274
        %284 = vst.msk [vmem:[%s153 + $0x28] sm:$0x7f] %vm279, %v275
        %285 = vst.msk [vmem:[%s153 + $0x30] sm:$0xff] %vm164, %v276
        %286 = vst.msk [vmem:[%s153 + $0x38] sm:$0x7f] %vm279, %v277
        %s287 = sand.u32 %s68, 1
        %s288 = scalar_lea.sflag [#allocation5], %s287
        %s289 = sand.u32 %s68, 1
        %s290 = smul.addr %s289, 64
        %s291 = scalar_lea.vmem [#allocation6], %s290
        // Predicated region
        $region29: #{tpu_custom_call.1} parent=23 // pred_check
          %p292 = pneg %p78
        $region30: #{tpu_custom_call.1} parent=23 // pred_check_branch
          %294 = sbr.rel (%p292) target = $region32
        $region31: #{tpu_custom_call.1} parent=23 // pred_region
          %s295 = smul.u32 4, %s23
          %s297 = ssub.s32 1024, 1024
          %298 = vsyncadd %s288, %s297
          %s299 = smul.addr %s295, 2
          %s300 = smul.addr %s22, 8
          %s301 = sadd.s32 %s299, %s300
          %s302 = smul.addr %s301, 128
          %s303 = scalar_lea.hbm %s1, %s302
          %s304 = sshll.u32 %s291, 4
          %s305 = int_to_ptr.vmem [resolvable:$true] %s304
          %310 = dma.vmem_to_hbm [thread:$0]  %s305, 1024, %s303, %s288, 128, 128, 8
        $region32: #{tpu_custom_call.1} parent=23 // pred_fallthru
          _
      $region24: #{tpu_custom_call.1} parent=5 // pred_fallthru
        _
      %p311 = scmp.le.s32.totalorder 2, %s13
      // Predicated region
      $region33: #{tpu_custom_call.1} parent=5 // pred_check
        %p312 = pneg %p311
      $region34: #{tpu_custom_call.1} parent=5 // pred_check_branch
        %314 = sbr.rel (%p312) target = $region36
      $region35: #{tpu_custom_call.1} parent=5 // pred_region
        %s315 = ssub.s32 %s13, 2
        // Predicated region
        $region37: #{tpu_custom_call.1} parent=35 // pred_check
          %p316 = pneg %p84
        $region38: #{tpu_custom_call.1} parent=35 // pred_check_branch
          %318 = sbr.rel (%p316) target = $region40
        $region39: #{tpu_custom_call.1} parent=35 // pred_region
          %s319 = sand.u32 %s69, 1
          %s320 = scalar_lea.sflag [#allocation5], %s319
          %s321 = sand.u32 %s69, 1
          %s322 = smul.addr %s321, 64
          %s323 = scalar_lea.vmem [#allocation6], %s322
          %324 = dma.done %s320, 1024
        $region40: #{tpu_custom_call.1} parent=35 // pred_fallthru
          _
      $region36: #{tpu_custom_call.1} parent=5 // pred_fallthru
        _
    $region6: #{tpu_custom_call.1} parent=1 // loop_footer
      %s17 = sadd.s32 1, %s13
    $region7: #{tpu_custom_call.1} parent=1 // loop_footer_branch
      %12 = sbr.rel target = $region3
    $region8: #{tpu_custom_call.1} parent=1 // loop_exit
      _
    %325 = vsyncpa [#allocation4], 1
    %s326 = scalar_lea.sflag [#allocation4], 1
    %327 = vsyncpa %s326, 1
    %328 = vsyncpa [#allocation5], 1
    %s329 = scalar_lea.sflag [#allocation5], 1
    %330 = vsyncpa %s329, 1

</llo_original>
